<compile_context>
chip_gen: v7x
topology: tpu7x:2x2x1
jax: 0.10.0
libtpu: 0.0.40
codegen_flags: <defaults>
</compile_context>

<pallas_src>
import jax
import jax.numpy as jnp
from jax.experimental import pallas as pl
from jax.experimental.pallas import tpu as pltpu

# ---- "config" (the PyTorch module references a global `config`) -------------
VOCAB_SIZE = 64     # config-derived vocab size
D_MODEL = 32        # config.d_model
PADDING_SIZE = 8    # config.padding_size
PAD = 0             # config.PAD  (padding_idx -> zero embedding row)
UNK = 1             # config.UNK  (token used to pad short sequences)


# ---------------------------- Pallas kernel ---------------------------------
def embedding_kernel(ids_ref, table_ref, out_ref):
    """One tile_m-token tile per grid step.

    ids_ref:   (tile_m, 1) int32   token ids for this tile (sublane column)
    table_ref: (V, D)      float32 full embedding table, resident in VMEM
    out_ref:   (tile_m, D) float32 gathered embeddings, row-major
    """
    ids = ids_ref[...]                                    # (tile_m, 1)
    v = table_ref.shape[0]
    tile_m = ids.shape[0]
    # One-hot selector built on the VPU in f32 (no bf16 in the compare path).
    # NOTE: out-of-range / negative ids yield an all-zero row here, whereas
    # nn.Embedding raises; upstream padding only ever produces ids in [0, V).
    vocab_iota = jax.lax.broadcasted_iota(jnp.int32, (tile_m, v), 1)
    onehot = (vocab_iota == ids).astype(table_ref.dtype)  # (tile_m, V)
    # Single MXU matmul: (tile_m, V) @ (V, D) -> (tile_m, D), stored directly
    # in the module's row-major layout (no kernel or wrapper transposes).
    out_ref[...] = jnp.dot(
        onehot, table_ref[...], preferred_element_type=jnp.float32
    ).astype(out_ref.dtype)


def _pick_tile_m(m):
    # 128 matches v5e's 128x128 MXUs and keeps padding waste tiny for small M;
    # 256 fills v6e/v7x's 256-wide MXU and keeps num_tiles >= 2 (both v7x
    # TensorCores busy on the "parallel" grid axis) once there is real work.
    return 128 if m <= 256 else 256


@jax.jit
def embedding_lookup(ids, table):
    """ids: (B, S) int32, table: (V, D) float32 -> (B, S, D) float32."""
    B, S = ids.shape
    V, D = table.shape
    M = B * S

    tile_m = _pick_tile_m(M)
    num_tiles = max(1, pl.cdiv(M, tile_m))
    m_pad = num_tiles * tile_m

    # Flatten (B, S) -> M tokens, pad to whole tiles, carry as an (m_pad, 1)
    # column so the (tile_m, 1) block is legal for any tile count.
    ids_col = jnp.pad(
        ids.reshape(M).astype(jnp.int32), (0, m_pad - M), constant_values=PAD
    ).reshape(m_pad, 1)

    out = pl.pallas_call(
        embedding_kernel,
        out_shape=jax.ShapeDtypeStruct((m_pad, D), table.dtype),
        grid=(num_tiles,),
        in_specs=[
            pl.BlockSpec((tile_m, 1), lambda t: (t, 0)),        # ids column
            pl.BlockSpec((V, D), lambda t: (0, 0),              # full table,
                         pipeline_mode=pl.Buffered(1)),         # grid-invariant
        ],
        out_specs=pl.BlockSpec((tile_m, D), lambda t: (t, 0)),  # (tile_m, 32)
        compiler_params=pltpu.CompilerParams(
            dimension_semantics=("parallel",)),
    )(ids_col, table)

    # Slice off tile padding + reshape: fused into this same jit (no extra
    # dispatch, no wrapper-side transpose any more).
    return out[:M].reshape(B, S, D)


# ---------------------------- Python glue -----------------------------------
def pad_token_lists(x, padding_size=PADDING_SIZE, unk=UNK):
    """Mirror of the Python list padding in Embedding.forward (host side)."""
    padded = []
    for row in x:
        row = list(row)
        if len(row) < padding_size:
            row = row + [unk] * (padding_size - len(row))
        else:
            # original code truncates to config.padding_idx (a bug); we use
            # padding_size so the result is a rectangular (B, S) tensor.
            row = row[:padding_size]
        padded.append(row)
    return jnp.asarray(padded, dtype=jnp.int32)


def make_embedding_table(key, vocab_size=VOCAB_SIZE, d_model=D_MODEL, pad=PAD):
    """Deterministic nn.Embedding-style init: N(0,1) weights, zero PAD row."""
    table = jax.random.normal(key, (vocab_size, d_model), dtype=jnp.float32)
    table = table.at[pad].set(0.0)   # padding_idx behavior
    return table


class Embedding:
    def __init__(self, vocab_size, key):
        self.table = make_embedding_table(key, vocab_size, D_MODEL, PAD)

    def forward(self, x):
        ids = pad_token_lists(x, PADDING_SIZE, UNK)   # host list glue
        return embedding_lookup(ids, self.table)      # single jitted dispatch


# ------------------------------- main ----------------------------------------
if __name__ == "__main__":
    key = jax.random.PRNGKey(0)
    k_table, _ = jax.random.split(key)

    module = Embedding(VOCAB_SIZE, k_table)

    # Ragged batch of token-id lists (all shorter than padding_size).
    x = [
        [5, 7, 3],
        [9, 2, 11, 4, 6],
    ]

    out = module.forward(x)
    out = jax.block_until_ready(out)

    # Reference check: plain JAX gather on the padded ids.
    ids = pad_token_lists(x)
    ref = jnp.take(module.table, ids, axis=0)
    assert out.shape == (len(x), PADDING_SIZE, D_MODEL)
    assert out.dtype == jnp.float32
    assert jnp.allclose(out, ref, atol=1e-6), "mismatch vs reference gather"

    print("KERNEL_OK")
</pallas_src>

<mosaic_0001>
module attributes {stable_mosaic.version = 11 : i64} {
  func.func @embedding_kernel(%arg0: i32, %arg1: memref<128x1xi32, #tpu.memory_space<vmem>>, %arg2: memref<64x32xf32, #tpu.memory_space<vmem>>, %arg3: memref<128x32xf32, #tpu.memory_space<vmem>>) attributes {dimension_semantics = [#tpu.dimension_semantics<parallel>], iteration_bounds = array<i64: 1>, scalar_prefetch = 0 : i64, scratch_operands = 0 : i64, tpu.core_type = #tpu.core_type<tc>, window_params = [{transform_indices = @transform_0, window_bounds = array<i64: 128, 1>}, {pipeline_mode = #tpu.pipeline_mode<synchronous>, transform_indices = @transform_1, window_bounds = array<i64: 64, 32>}, {transform_indices = @transform_2, window_bounds = array<i64: 128, 32>}]} {
    %c0 = arith.constant 0 : index
    %c0_0 = arith.constant 0 : index
    %0 = vector.load %arg1[%c0, %c0_0] : memref<128x1xi32, #tpu.memory_space<vmem>>, vector<128x1xi32>
    %1 = tpu.iota {dimensions = array<i32: 1>} : vector<128x64xi32>
    %2 = vector.broadcast %0 : vector<128x1xi32> to vector<128x64xi32>
    %3 = arith.cmpi eq, %1, %2 : vector<128x64xi32>
    %4 = arith.extui %3 : vector<128x64xi1> to vector<128x64xi32>
    %5 = arith.sitofp %4 : vector<128x64xi32> to vector<128x64xf32>
    %c0_1 = arith.constant 0 : index
    %c0_2 = arith.constant 0 : index
    %6 = vector.load %arg2[%c0_1, %c0_2] : memref<64x32xf32, #tpu.memory_space<vmem>>, vector<64x32xf32>
    %cst = arith.constant dense<0.000000e+00> : vector<128x32xf32>
    %7 = tpu.matmul %5, %6, %cst {dimension_numbers = #tpu.dot_dimension_numbers<[1], [0], [0], [1], [0, 0, 1, 1], [], []>} : vector<128x64xf32>, vector<64x32xf32>, vector<128x32xf32> -> vector<128x32xf32>
    %c0_3 = arith.constant 0 : index
    %c0_4 = arith.constant 0 : index
    %8 = vector.load %arg3[%c0_3, %c0_4] : memref<128x32xf32, #tpu.memory_space<vmem>>, vector<128x32xf32>
    tpu.vector_store %arg3[%c0_3, %c0_4], %7 {strides = array<i32>} : memref<128x32xf32, #tpu.memory_space<vmem>>, vector<128x32xf32>,
    return
  }
  func.func @transform_0(%arg0: i32) -> (i32, i32) {
    %c0_i32 = arith.constant 0 : i32
    %c0_i32_0 = arith.constant 0 : i32
    return %arg0, %c0_i32 : i32, i32
  }
  func.func @transform_1(%arg0: i32) -> (i32, i32) {
    %c0_i32 = arith.constant 0 : i32
    %c0_i32_0 = arith.constant 0 : i32
    %c0_i32_1 = arith.constant 0 : i32
    return %c0_i32, %c0_i32_0 : i32, i32
  }
  func.func @transform_2(%arg0: i32) -> (i32, i32) {
    %c0_i32 = arith.constant 0 : i32
    %c0_i32_0 = arith.constant 0 : i32
    return %arg0, %c0_i32 : i32, i32
  }
}

</mosaic_0001>

<llo_original>
// kernel: embedding_lookup.1
$region0: #{embedding_lookup.1}
  #allocation0 [shape = 'u32[]', space=smem, size = 0x4, offset = 0x4, fixed_abs, tag = 'smem constant byte address 0x4 - core index']
  #allocation1 [shape = 'u32[144,128]{1,0:T(1,128)}', space=vmem, size = 0x12000, scoped, tag = 'internal scratch']
  %s0 = inlined_call_operand.vmem [shape: s32[128,1], index: 0, kind: input, shape index: {}]
  %s1 = inlined_call_operand.vmem [shape: f32[64,32], index: 1, kind: input, shape index: {}]
  %s2 = inlined_call_operand.vmem [shape: f32[128,32], index: 2, kind: output, shape index: {}]
  %s3 = sld [smem:[#allocation0]]
  $region18: #{embedding_lookup.1} parent=0
    _
  %s5 = ssub.s32 1, %s3
  %s6 = scalar_select 0, %s5, %s3
  // Predicated region
  $region2: #{embedding_lookup.1} parent=0 // pred_check
    _
  $region3: #{embedding_lookup.1} parent=0 // pred_check_branch
    %8 = sbr.rel (0) target = $region5
  $region4: #{embedding_lookup.1} parent=0 // pred_region
    _
  $region5: #{embedding_lookup.1} parent=0 // pred_fallthru
    _
  // Predicated region
  $region6: #{embedding_lookup.1} parent=0 // pred_check
    _
  $region7: #{embedding_lookup.1} parent=0 // pred_check_branch
    %10 = sbr.rel (0) target = $region9
  $region8: #{embedding_lookup.1} parent=0 // pred_region
    _
  $region9: #{embedding_lookup.1} parent=0 // pred_fallthru
    _
  %v11 = vld [vmem:[%s0] sm:$0xff]
  %v12 = vld [vmem:[%s0 + $0x8] sm:$0xff]
  %v13 = vld [vmem:[%s0 + $0x10] sm:$0xff]
  %v14 = vld [vmem:[%s0 + $0x18] sm:$0xff]
  %v15 = vld [vmem:[%s0 + $0x20] sm:$0xff]
  %v16 = vld [vmem:[%s0 + $0x28] sm:$0xff]
  %v17 = vld [vmem:[%s0 + $0x30] sm:$0xff]
  %v18 = vld [vmem:[%s0 + $0x38] sm:$0xff]
  %v19 = vld [vmem:[%s0 + $0x40] sm:$0xff]
  %v20 = vld [vmem:[%s0 + $0x48] sm:$0xff]
  %v21 = vld [vmem:[%s0 + $0x50] sm:$0xff]
  %v22 = vld [vmem:[%s0 + $0x58] sm:$0xff]
  %v23 = vld [vmem:[%s0 + $0x60] sm:$0xff]
  %v24 = vld [vmem:[%s0 + $0x68] sm:$0xff]
  %v25 = vld [vmem:[%s0 + $0x70] sm:$0xff]
  %v26 = vld [vmem:[%s0 + $0x78] sm:$0xff]
  %v27 = vlaneseq
  %v28 = vand.u32 %v27, 127
  %29 = vset.pattern.permute.xlu0 0
  %30 = vperm.xlu0 %29, %v11
  %v31 = vpop.permute.xlu0 %30
  %32 = vset.pattern.permute.xlu0 0
  %33 = vperm.xlu0 %32, %v12
  %v34 = vpop.permute.xlu0 %33
  %35 = vset.pattern.permute.xlu0 0
  %36 = vperm.xlu0 %35, %v13
  %v37 = vpop.permute.xlu0 %36
  %38 = vset.pattern.permute.xlu0 0
  %39 = vperm.xlu0 %38, %v14
  %v40 = vpop.permute.xlu0 %39
  %41 = vset.pattern.permute.xlu0 0
  %42 = vperm.xlu0 %41, %v15
  %v43 = vpop.permute.xlu0 %42
  %44 = vset.pattern.permute.xlu0 0
  %45 = vperm.xlu0 %44, %v16
  %v46 = vpop.permute.xlu0 %45
  %47 = vset.pattern.permute.xlu0 0
  %48 = vperm.xlu0 %47, %v17
  %v49 = vpop.permute.xlu0 %48
  %50 = vset.pattern.permute.xlu0 0
  %51 = vperm.xlu0 %50, %v18
  %v52 = vpop.permute.xlu0 %51
  %53 = vset.pattern.permute.xlu0 0
  %54 = vperm.xlu0 %53, %v19
  %v55 = vpop.permute.xlu0 %54
  %56 = vset.pattern.permute.xlu0 0
  %57 = vperm.xlu0 %56, %v20
  %v58 = vpop.permute.xlu0 %57
  %59 = vset.pattern.permute.xlu0 0
  %60 = vperm.xlu0 %59, %v21
  %v61 = vpop.permute.xlu0 %60
  %62 = vset.pattern.permute.xlu0 0
  %63 = vperm.xlu0 %62, %v22
  %v64 = vpop.permute.xlu0 %63
  %65 = vset.pattern.permute.xlu0 0
  %66 = vperm.xlu0 %65, %v23
  %v67 = vpop.permute.xlu0 %66
  %68 = vset.pattern.permute.xlu0 0
  %69 = vperm.xlu0 %68, %v24
  %v70 = vpop.permute.xlu0 %69
  %71 = vset.pattern.permute.xlu0 0
  %72 = vperm.xlu0 %71, %v25
  %v73 = vpop.permute.xlu0 %72
  %74 = vset.pattern.permute.xlu0 0
  %75 = vperm.xlu0 %74, %v26
  %v76 = vpop.permute.xlu0 %75
  %vm77 = vcmp.eq.s32.totalorder %v28, %v31
  %vm78 = vcmp.eq.s32.totalorder %v28, %v34
  %vm79 = vcmp.eq.s32.totalorder %v28, %v37
  %vm80 = vcmp.eq.s32.totalorder %v28, %v40
  %vm81 = vcmp.eq.s32.totalorder %v28, %v43
  %vm82 = vcmp.eq.s32.totalorder %v28, %v46
  %vm83 = vcmp.eq.s32.totalorder %v28, %v49
  %vm84 = vcmp.eq.s32.totalorder %v28, %v52
  %vm85 = vcmp.eq.s32.totalorder %v28, %v55
  %vm86 = vcmp.eq.s32.totalorder %v28, %v58
  %vm87 = vcmp.eq.s32.totalorder %v28, %v61
  %vm88 = vcmp.eq.s32.totalorder %v28, %v64
  %vm89 = vcmp.eq.s32.totalorder %v28, %v67
  %vm90 = vcmp.eq.s32.totalorder %v28, %v70
  %vm91 = vcmp.eq.s32.totalorder %v28, %v73
  %vm92 = vcmp.eq.s32.totalorder %v28, %v76
  %v93 = vsel %vm77, 1, 0
  %v94 = vsel %vm78, 1, 0
  %v95 = vsel %vm79, 1, 0
  %v96 = vsel %vm80, 1, 0
  %v97 = vsel %vm81, 1, 0
  %v98 = vsel %vm82, 1, 0
  %v99 = vsel %vm83, 1, 0
  %v100 = vsel %vm84, 1, 0
  %v101 = vsel %vm85, 1, 0
  %v102 = vsel %vm86, 1, 0
  %v103 = vsel %vm87, 1, 0
  %v104 = vsel %vm88, 1, 0
  %v105 = vsel %vm89, 1, 0
  %v106 = vsel %vm90, 1, 0
  %v107 = vsel %vm91, 1, 0
  %v108 = vsel %vm92, 1, 0
  %v109 = vcvt.s32.f32 %v93
  %v110 = vcvt.s32.f32 %v94
  %v111 = vcvt.s32.f32 %v95
  %v112 = vcvt.s32.f32 %v96
  %v113 = vcvt.s32.f32 %v97
  %v114 = vcvt.s32.f32 %v98
  %v115 = vcvt.s32.f32 %v99
  %v116 = vcvt.s32.f32 %v100
  %v117 = vcvt.s32.f32 %v101
  %v118 = vcvt.s32.f32 %v102
  %v119 = vcvt.s32.f32 %v103
  %v120 = vcvt.s32.f32 %v104
  %v121 = vcvt.s32.f32 %v105
  %v122 = vcvt.s32.f32 %v106
  %v123 = vcvt.s32.f32 %v107
  %v124 = vcvt.s32.f32 %v108
  %v125 = vld [vmem:[%s1] sm:$0xff]
  %v126 = vld [vmem:[%s1 + $0x8] sm:$0xff]
  %v127 = vld [vmem:[%s1 + $0x10] sm:$0xff]
  %v128 = vld [vmem:[%s1 + $0x18] sm:$0xff]
  %v129 = vld [vmem:[%s1 + $0x20] sm:$0xff]
  %v130 = vld [vmem:[%s1 + $0x28] sm:$0xff]
  %v131 = vld [vmem:[%s1 + $0x30] sm:$0xff]
  %v132 = vld [vmem:[%s1 + $0x38] sm:$0xff]
  %vm133 = vcmask 523264
  %v135 = vsel %vm133, %v109, 0
  %v138 = vsel %vm133, %v110, 0
  %v141 = vsel %vm133, %v111, 0
  %v144 = vsel %vm133, %v112, 0
  %v147 = vsel %vm133, %v113, 0
  %v150 = vsel %vm133, %v114, 0
  %v153 = vsel %vm133, %v115, 0
  %v156 = vsel %vm133, %v116, 0
  %v159 = vsel %vm133, %v117, 0
  %v162 = vsel %vm133, %v118, 0
  %v165 = vsel %vm133, %v119, 0
  %v168 = vsel %vm133, %v120, 0
  %v171 = vsel %vm133, %v121, 0
  %v174 = vsel %vm133, %v122, 0
  %v177 = vsel %vm133, %v123, 0
  %v180 = vsel %vm133, %v124, 0
  %182 = vmatprep.subr.mxu0 0.0
  %183 = vmatpush1.msra.mxu0 %v125
  %184 = vmatprep.subr.mxu0 0.0
  %185 = vmatpush1.msra.mxu0 %v126
  %186 = vmatprep.subr.mxu0 0.0
  %187 = vmatpush1.msra.mxu0 %v127
  %188 = vmatprep.subr.mxu0 0.0
  %189 = vmatpush1.msra.mxu0 %v128
  %190 = vmatprep.subr.mxu0 0.0
  %191 = vmatpush1.msra.mxu0 %v129
  %192 = vmatprep.subr.mxu0 0.0
  %193 = vmatpush1.msra.mxu0 %v130
  %194 = vmatprep.subr.mxu0 0.0
  %195 = vmatpush1.msra.mxu0 %v131
  %196 = vmatprep.subr.mxu0 0.0
  %197 = vmatpush1.msra.mxu0 %v132
  %198 = vmatprep.subr.mxu0 0.0
  %199 = vmatpush1.msra.mxu0 0.0
  %200 = vmatprep.subr.mxu0 0.0
  %201 = vmatpush1.msra.mxu0 0.0
  %202 = vmatprep.subr.mxu0 0.0
  %203 = vmatpush1.msra.mxu0 0.0
  %204 = vmatprep.subr.mxu0 0.0
  %205 = vmatpush1.msra.mxu0 0.0
  %206 = vmatprep.subr.mxu0 0.0
  %207 = vmatpush1.msra.mxu0 0.0
  %208 = vmatprep.subr.mxu0 0.0
  %209 = vmatpush1.msra.mxu0 0.0
  %210 = vmatprep.subr.mxu0 0.0
  %211 = vmatpush1.msra.mxu0 0.0
  %212 = vmatprep.subr.mxu0 0.0
  %213 = vmatpush1.msra.mxu0 0.0
  %214 = vmatprep.subr.mxu0 0.0
  %215 = vmatpush1.msra.mxu0 0.0
  %216 = vmatprep.subr.mxu0 0.0
  %217 = vmatpush1.msra.mxu0 0.0
  %218 = vmatprep.subr.mxu0 0.0
  %219 = vmatpush1.msra.mxu0 0.0
  %220 = vmatprep.subr.mxu0 0.0
  %221 = vmatpush1.msra.mxu0 0.0
  %222 = vmatprep.subr.mxu0 0.0
  %223 = vmatpush1.msra.mxu0 0.0
  %224 = vmatprep.subr.mxu0 0.0
  %225 = vmatpush1.msra.mxu0 0.0
  %226 = vmatprep.subr.mxu0 0.0
  %227 = vmatpush1.msra.mxu0 0.0
  %228 = vmatprep.subr.mxu0 0.0
  %229 = vmatpush1.msra.mxu0 0.0
  %230 = vmatprep.subr.mxu0 0.0
  %231 = vmatpush1.msra.mxu0 0.0
  %232 = vmatprep.subr.mxu0 0.0
  %233 = vmatpush1.msra.mxu0 0.0
  %234 = vmatprep.subr.mxu0 0.0
  %235 = vmatpush1.msra.mxu0 0.0
  %236 = vmatprep.subr.mxu0 0.0
  %237 = vmatpush1.msra.mxu0 0.0
  %238 = vmatprep.subr.mxu0 0.0
  %239 = vmatpush1.msra.mxu0 0.0
  %240 = vmatprep.subr.mxu0 0.0
  %241 = vmatpush1.msra.mxu0 0.0
  %242 = vmatprep.subr.mxu0 0.0
  %243 = vmatpush1.msra.mxu0 0.0
  %244 = vmatprep.subr.mxu0 0.0
  %245 = vmatpush1.msra.mxu0 0.0
  %246 = vmatprep.mubr.f32.mxu0 0.0
  %247 = vmatmul.mubr.f32.gmra.mrb[0].mxu0 %v135
  %v248 = vpop.f32.mrb[0].mxu0
  %v249 = vadd.f32 0.0, %v248
  %v250 = vpop.f32.mrb[0].mxu0
  %251 = vmatprep.mubr.f32.mxu0 0.0
  %252 = vmatmul.mubr.f32.gmra.mrb[0].mxu0 %v138
  %v253 = vpop.f32.mrb[0].mxu0
  %v254 = vadd.f32 0.0, %v253
  %v255 = vpop.f32.mrb[0].mxu0
  %256 = vmatprep.mubr.f32.mxu0 0.0
  %257 = vmatmul.mubr.f32.gmra.mrb[0].mxu0 %v141
  %v258 = vpop.f32.mrb[0].mxu0
  %v259 = vadd.f32 0.0, %v258
  %v260 = vpop.f32.mrb[0].mxu0
  %261 = vmatprep.mubr.f32.mxu0 0.0
  %262 = vmatmul.mubr.f32.gmra.mrb[0].mxu0 %v144
  %v263 = vpop.f32.mrb[0].mxu0
  %v264 = vadd.f32 0.0, %v263
  %v265 = vpop.f32.mrb[0].mxu0
  %266 = vmatprep.mubr.f32.mxu0 0.0
  %267 = vmatmul.mubr.f32.gmra.mrb[0].mxu0 %v147
  %v268 = vpop.f32.mrb[0].mxu0
  %v269 = vadd.f32 0.0, %v268
  %v270 = vpop.f32.mrb[0].mxu0
  %271 = vmatprep.mubr.f32.mxu0 0.0
  %272 = vmatmul.mubr.f32.gmra.mrb[0].mxu0 %v150
  %v273 = vpop.f32.mrb[0].mxu0
  %v274 = vadd.f32 0.0, %v273
  %v275 = vpop.f32.mrb[0].mxu0
  %276 = vmatprep.mubr.f32.mxu0 0.0
  %277 = vmatmul.mubr.f32.gmra.mrb[0].mxu0 %v153
  %v278 = vpop.f32.mrb[0].mxu0
  %v279 = vadd.f32 0.0, %v278
  %v280 = vpop.f32.mrb[0].mxu0
  %281 = vmatprep.mubr.f32.mxu0 0.0
  %282 = vmatmul.mubr.f32.gmra.mrb[0].mxu0 %v156
  %v283 = vpop.f32.mrb[0].mxu0
  %v284 = vadd.f32 0.0, %v283
  %v285 = vpop.f32.mrb[0].mxu0
  %286 = vmatprep.mubr.f32.mxu0 0.0
  %287 = vmatmul.mubr.f32.gmra.mrb[0].mxu0 %v159
  %v288 = vpop.f32.mrb[0].mxu0
  %v289 = vadd.f32 0.0, %v288
  %v290 = vpop.f32.mrb[0].mxu0
  %291 = vmatprep.mubr.f32.mxu0 0.0
  %292 = vmatmul.mubr.f32.gmra.mrb[0].mxu0 %v162
  %v293 = vpop.f32.mrb[0].mxu0
  %v294 = vadd.f32 0.0, %v293
  %v295 = vpop.f32.mrb[0].mxu0
  %296 = vmatprep.mubr.f32.mxu0 0.0
  %297 = vmatmul.mubr.f32.gmra.mrb[0].mxu0 %v165
  %v298 = vpop.f32.mrb[0].mxu0
  %v299 = vadd.f32 0.0, %v298
  %v300 = vpop.f32.mrb[0].mxu0
  %301 = vmatprep.mubr.f32.mxu0 0.0
  %302 = vmatmul.mubr.f32.gmra.mrb[0].mxu0 %v168
  %v303 = vpop.f32.mrb[0].mxu0
  %v304 = vadd.f32 0.0, %v303
  %v305 = vpop.f32.mrb[0].mxu0
  %306 = vmatprep.mubr.f32.mxu0 0.0
  %307 = vmatmul.mubr.f32.gmra.mrb[0].mxu0 %v171
  %v308 = vpop.f32.mrb[0].mxu0
  %v309 = vadd.f32 0.0, %v308
  %v310 = vpop.f32.mrb[0].mxu0
  %311 = vmatprep.mubr.f32.mxu0 0.0
  %312 = vmatmul.mubr.f32.gmra.mrb[0].mxu0 %v174
  %v313 = vpop.f32.mrb[0].mxu0
  %v314 = vadd.f32 0.0, %v313
  %v315 = vpop.f32.mrb[0].mxu0
  %316 = vmatprep.mubr.f32.mxu0 0.0
  %317 = vmatmul.mubr.f32.gmra.mrb[0].mxu0 %v177
  %v318 = vpop.f32.mrb[0].mxu0
  %v319 = vadd.f32 0.0, %v318
  %v320 = vpop.f32.mrb[0].mxu0
  %321 = vmatprep.mubr.f32.mxu0 0.0
  %322 = vmatmul.mubr.f32.gmra.mrb[0].mxu0 %v180
  %v323 = vpop.f32.mrb[0].mxu0
  %v324 = vadd.f32 0.0, %v323
  %v325 = vpop.f32.mrb[0].mxu0
  %326 = vdwg.mxu0
  %vm327 = vcmask 261120
  %328 = vst.msk [vmem:[%s2] sm:$0xff] %vm327, %v249
  %329 = vst.msk [vmem:[%s2 + $0x8] sm:$0xff] %vm327, %v254
  %330 = vst.msk [vmem:[%s2 + $0x10] sm:$0xff] %vm327, %v259
  %331 = vst.msk [vmem:[%s2 + $0x18] sm:$0xff] %vm327, %v264
  %332 = vst.msk [vmem:[%s2 + $0x20] sm:$0xff] %vm327, %v269
  %333 = vst.msk [vmem:[%s2 + $0x28] sm:$0xff] %vm327, %v274
  %334 = vst.msk [vmem:[%s2 + $0x30] sm:$0xff] %vm327, %v279
  %335 = vst.msk [vmem:[%s2 + $0x38] sm:$0xff] %vm327, %v284
  %336 = vst.msk [vmem:[%s2 + $0x40] sm:$0xff] %vm327, %v289
  %337 = vst.msk [vmem:[%s2 + $0x48] sm:$0xff] %vm327, %v294
  %338 = vst.msk [vmem:[%s2 + $0x50] sm:$0xff] %vm327, %v299
  %339 = vst.msk [vmem:[%s2 + $0x58] sm:$0xff] %vm327, %v304
  %340 = vst.msk [vmem:[%s2 + $0x60] sm:$0xff] %vm327, %v309
  %341 = vst.msk [vmem:[%s2 + $0x68] sm:$0xff] %vm327, %v314
  %342 = vst.msk [vmem:[%s2 + $0x70] sm:$0xff] %vm327, %v319
  %343 = vst.msk [vmem:[%s2 + $0x78] sm:$0xff] %vm327, %v324
  // Predicated region
  $region10: #{embedding_lookup.1} parent=0 // pred_check
    _
  $region11: #{embedding_lookup.1} parent=0 // pred_check_branch
    %345 = sbr.rel (0) target = $region13
  $region12: #{embedding_lookup.1} parent=0 // pred_region
    _
  $region13: #{embedding_lookup.1} parent=0 // pred_fallthru
    _
  // Predicated region
  $region14: #{embedding_lookup.1} parent=0 // pred_check
    _
  $region15: #{embedding_lookup.1} parent=0 // pred_check_branch
    %347 = sbr.rel (0) target = $region17
  $region16: #{embedding_lookup.1} parent=0 // pred_region
    _
  $region17: #{embedding_lookup.1} parent=0 // pred_fallthru
    _

</llo_original>
